<compile_context>
chip_gen: v7x
topology: tpu7x:2x2x1
jax: 0.10.0
libtpu: 0.0.40
codegen_flags: <defaults>
</compile_context>

<pallas_src>
import functools

import numpy as np

import jax
import jax.numpy as jnp
from jax.experimental import pallas as pl
from jax.experimental.pallas import tpu as pltpu


# ---------------------------------------------------------------------------
# Fused kernel
# ---------------------------------------------------------------------------
def _fused_same_diff_kernel(*refs, nlayers, rpb, C, mm_dtype):
    """One grid step processes `rpb` rounds = rpb*C*C rows of the flattened input.

    refs = (x, w1, b1, ..., wL, bL, sel_diag, sel_off, out)
      x        : (rpb*C*C, ninput)   mm_dtype
      wi       : (fan_in, fan_out)   mm_dtype
      bi       : (1, fan_out)        float32
      sel_diag : (rpb*C, rpb*C*C)    float32   block-diag 0/1 diagonal selector
      sel_off  : (rpb*C, rpb*C*C)    float32   block-diag 1/(C-1) off-diag averager
      out      : (rpb, C, 2*nh)      float32
    """
    x_ref = refs[0]
    wb_refs = refs[1:1 + 2 * nlayers]
    sel_d_ref = refs[1 + 2 * nlayers]
    sel_o_ref = refs[2 + 2 * nlayers]
    o_ref = refs[3 + 2 * nlayers]

    # --- fused MLP: all layers stay in VMEM / vregs -------------------------
    h = x_ref[...]                                      # (rpb*C*C, ninput)
    for li in range(nlayers):
        w_ref = wb_refs[2 * li]
        b_ref = wb_refs[2 * li + 1]
        acc = jnp.dot(h.astype(mm_dtype), w_ref[...],
                      preferred_element_type=jnp.float32)
        acc = acc + b_ref[...]                          # f32 bias add (broadcast)
        h = jnp.maximum(acc, 0.0) if li < nlayers - 1 else acc

    # --- diag rows + off-diag row means as selection matmuls (f32) ----------
    diag = jnp.dot(sel_d_ref[...], h, preferred_element_type=jnp.float32)
    off = jnp.dot(sel_o_ref[...], h, preferred_element_type=jnp.float32)
    out = jnp.concatenate([diag, off], axis=-1)         # (rpb*C, 2*nh), lane dense

    for r in range(rpb):                                # static unroll, rpb is small
        o_ref[r, :, :] = out[r * C:(r + 1) * C, :].astype(o_ref.dtype)


# ---------------------------------------------------------------------------
# Wrapper
# ---------------------------------------------------------------------------
def _choose_rounds_per_block(R, C):
    """Rounds per grid block: bounded working set, >=2 grid steps when R >= 2,
    and sublane-aligned (rpb*C*C multiple of 16 so bf16/f32 blocks are legal)."""
    rows_per_round = C * C
    cap = max(1, 1024 // rows_per_round)        # keep x/out tiles small in VMEM
    cap = min(cap, max(1, (R + 1) // 2))        # >=2 grid steps (megacore on v7x)
    cap = min(cap, R)
    for rpb in range(cap, 0, -1):
        if (rpb * rows_per_round) % 16 == 0:
            return rpb
    return R                                    # single full block (always legal)


def _make_selectors(C, rpb):
    """Block-diagonal selection matrices for one block of rpb rounds."""
    sel_d = np.zeros((C, C * C), np.float32)
    sel_o = np.zeros((C, C * C), np.float32)
    for i in range(C):
        for j in range(C):
            if i == j:
                sel_d[i, i * C + j] = 1.0
            else:
                # Matches torch: sorted off-diag indices grouped per row, mean(2).
                sel_o[i, i * C + j] = 1.0 / (C - 1)
    eye = np.eye(rpb, dtype=np.float32)
    return np.kron(eye, sel_d), np.kron(eye, sel_o)


def same_diff_encoder_forward(fv, params, *, mm_dtype=jnp.bfloat16):
    """Pallas implementation of same_diff_encoder.forward.

    fv: (rounds, nclasses, nclasses, ninput) float32
    params: list of (W, b) with W stored as (in_features, out_features)
    returns: (rounds, nclasses, 2*nh) float32
    """
    R, C, C2, ninput = fv.shape
    assert C == C2 and C >= 2, (C, C2)
    nlayers = len(params)
    nh = params[-1][0].shape[1]

    rpb = _choose_rounds_per_block(R, C)
    n_blocks = pl.cdiv(R, rpb)
    R_pad = n_blocks * rpb
    rows_blk = rpb * C * C

    x = fv.reshape(R * C * C, ninput)
    if R_pad != R:
        x = jnp.pad(x, ((0, (R_pad - R) * C * C), (0, 0)))
    x = x.astype(mm_dtype)                               # halve HBM traffic

    sel_d_np, sel_o_np = _make_selectors(C, rpb)
    sel_d = jnp.asarray(sel_d_np)
    sel_o = jnp.asarray(sel_o_np)

    wb_inputs = []
    wb_specs = []
    for (w, b) in params:
        K, N = w.shape
        wb_inputs += [w.astype(mm_dtype), b.reshape(1, N).astype(jnp.float32)]
        wb_specs += [pl.BlockSpec((K, N), lambda i: (0, 0)),
                     pl.BlockSpec((1, N), lambda i: (0, 0))]

    kernel = functools.partial(_fused_same_diff_kernel,
                               nlayers=nlayers, rpb=rpb, C=C, mm_dtype=mm_dtype)

    out = pl.pallas_call(
        kernel,
        out_shape=jax.ShapeDtypeStruct((R_pad, C, 2 * nh), jnp.float32),
        grid_spec=pl.GridSpec(
            grid=(n_blocks,),
            in_specs=[pl.BlockSpec((rows_blk, ninput), lambda i: (i, 0))]
                     + wb_specs
                     + [pl.BlockSpec((rpb * C, rows_blk), lambda i: (0, 0)),
                        pl.BlockSpec((rpb * C, rows_blk), lambda i: (0, 0))],
            out_specs=pl.BlockSpec((rpb, C, 2 * nh), lambda i: (i, 0, 0)),
        ),
        compiler_params=pltpu.CompilerParams(
            dimension_semantics=("parallel",),
        ),
    )(x, *wb_inputs, sel_d, sel_o)

    return out[:R]


# ---------------------------------------------------------------------------
# Params + reference
# ---------------------------------------------------------------------------
def init_mlp_params(key, ninput, nh, noutput, nlayers):
    """Deterministic init matching the PyTorch MLP layer shapes.
    Weights stored as (in_features, out_features)."""
    if nlayers == 1:
        dims = [(ninput, noutput)]
    else:
        dims = [(ninput, nh)]
        for _ in range(nlayers - 2):
            dims.append((nh, nh))
        dims.append((nh, noutput))

    params = []
    for (fan_in, fan_out) in dims:
        key, kw, kb = jax.random.split(key, 3)
        bound = 1.0 / jnp.sqrt(fan_in)
        w = jax.random.uniform(kw, (fan_in, fan_out), jnp.float32, -bound, bound)
        b = jax.random.uniform(kb, (fan_out,), jnp.float32, -bound, bound)
        params.append((w, b))
    return params


def same_diff_encoder_reference(fv, params):
    """Plain-JAX f32 reference for correctness check."""
    R, C, _, ninput = fv.shape
    h = fv.reshape(R * C * C, ninput)
    for i, (w, b) in enumerate(params):
        h = h @ w + b
        if i != len(params) - 1:
            h = jnp.maximum(h, 0.0)
    nh = h.shape[-1]
    h = h.reshape(R, C, C, nh)
    h_diag = h[:, jnp.arange(C), jnp.arange(C), :]        # (R, C, nh)
    h_off = (h.sum(axis=2) - h_diag) / (C - 1)            # mean over j != i
    return jnp.concatenate([h_diag, h_off], axis=-1)


# ---------------------------------------------------------------------------
if __name__ == "__main__":
    ninput, nh, nlayers = 32, 64, 3
    rounds, nclasses = 2, 4

    key = jax.random.PRNGKey(0)
    kx, kp = jax.random.split(key)

    fv = jax.random.normal(kx, (rounds, nclasses, nclasses, ninput), jnp.float32)
    params = init_mlp_params(kp, ninput, nh, nh, nlayers)   # MLP(ninput, nh, nh, L)

    out = same_diff_encoder_forward(fv, params)
    out = jax.block_until_ready(out)

    ref = same_diff_encoder_reference(fv, params)
    assert out.shape == (rounds, nclasses, 2 * nh), out.shape
    # bf16 matmul inputs with f32 accumulation -> compare to f32 ref at bf16 tolerance
    assert jnp.allclose(out, ref, atol=2e-2, rtol=2e-2), float(jnp.max(jnp.abs(out - ref)))

    print("KERNEL_OK")
</pallas_src>

<mosaic_0001>
module attributes {stable_mosaic.version = 11 : i64} {
  func.func @_fused_same_diff_kernel(%arg0: i32, %arg1: memref<16x32xbf16, #tpu.memory_space<vmem>>, %arg2: memref<32x64xbf16, #tpu.memory_space<vmem>>, %arg3: memref<1x64xf32, #tpu.memory_space<vmem>>, %arg4: memref<64x64xbf16, #tpu.memory_space<vmem>>, %arg5: memref<1x64xf32, #tpu.memory_space<vmem>>, %arg6: memref<64x64xbf16, #tpu.memory_space<vmem>>, %arg7: memref<1x64xf32, #tpu.memory_space<vmem>>, %arg8: memref<4x16xf32, #tpu.memory_space<vmem>>, %arg9: memref<4x16xf32, #tpu.memory_space<vmem>>, %arg10: memref<1x4x128xf32, #tpu.memory_space<vmem>>) attributes {dimension_semantics = [#tpu.dimension_semantics<parallel>], iteration_bounds = array<i64: 2>, scalar_prefetch = 0 : i64, scratch_operands = 0 : i64, tpu.core_type = #tpu.core_type<tc>, window_params = [{transform_indices = @transform_0, window_bounds = array<i64: 16, 32>}, {pipeline_mode = #tpu.pipeline_mode<synchronous>, transform_indices = @transform_1, window_bounds = array<i64: 32, 64>}, {pipeline_mode = #tpu.pipeline_mode<synchronous>, transform_indices = @transform_2, window_bounds = array<i64: 1, 64>}, {pipeline_mode = #tpu.pipeline_mode<synchronous>, transform_indices = @transform_3, window_bounds = array<i64: 64, 64>}, {pipeline_mode = #tpu.pipeline_mode<synchronous>, transform_indices = @transform_4, window_bounds = array<i64: 1, 64>}, {pipeline_mode = #tpu.pipeline_mode<synchronous>, transform_indices = @transform_5, window_bounds = array<i64: 64, 64>}, {pipeline_mode = #tpu.pipeline_mode<synchronous>, transform_indices = @transform_6, window_bounds = array<i64: 1, 64>}, {pipeline_mode = #tpu.pipeline_mode<synchronous>, transform_indices = @transform_7, window_bounds = array<i64: 4, 16>}, {pipeline_mode = #tpu.pipeline_mode<synchronous>, transform_indices = @transform_8, window_bounds = array<i64: 4, 16>}, {transform_indices = @transform_9, window_bounds = array<i64: 1, 4, 128>}]} {
    %c0 = arith.constant 0 : index
    %c0_0 = arith.constant 0 : index
    %0 = vector.load %arg1[%c0, %c0_0] : memref<16x32xbf16, #tpu.memory_space<vmem>>, vector<16x32xbf16>
    %c0_1 = arith.constant 0 : index
    %c0_2 = arith.constant 0 : index
    %1 = vector.load %arg2[%c0_1, %c0_2] : memref<32x64xbf16, #tpu.memory_space<vmem>>, vector<32x64xbf16>
    %cst = arith.constant dense<0.000000e+00> : vector<16x64xf32>
    %2 = tpu.matmul %0, %1, %cst {dimension_numbers = #tpu.dot_dimension_numbers<[1], [0], [0], [1], [0, 0, 1, 1], [], []>} : vector<16x32xbf16>, vector<32x64xbf16>, vector<16x64xf32> -> vector<16x64xf32>
    %c0_3 = arith.constant 0 : index
    %c0_4 = arith.constant 0 : index
    %3 = vector.load %arg3[%c0_3, %c0_4] : memref<1x64xf32, #tpu.memory_space<vmem>>, vector<1x64xf32>
    %4 = vector.broadcast %3 : vector<1x64xf32> to vector<16x64xf32>
    %5 = arith.addf %2, %4 : vector<16x64xf32>
    %cst_5 = arith.constant 0.000000e+00 : f32
    %6 = vector.broadcast %cst_5 : f32 to vector<16x64xf32>
    %7 = arith.maximumf %5, %6 : vector<16x64xf32>
    %8 = arith.truncf %7 : vector<16x64xf32> to vector<16x64xbf16>
    %c0_6 = arith.constant 0 : index
    %c0_7 = arith.constant 0 : index
    %9 = vector.load %arg4[%c0_6, %c0_7] : memref<64x64xbf16, #tpu.memory_space<vmem>>, vector<64x64xbf16>
    %cst_8 = arith.constant dense<0.000000e+00> : vector<16x64xf32>
    %10 = tpu.matmul %8, %9, %cst_8 {dimension_numbers = #tpu.dot_dimension_numbers<[1], [0], [0], [1], [0, 0, 1, 1], [], []>} : vector<16x64xbf16>, vector<64x64xbf16>, vector<16x64xf32> -> vector<16x64xf32>
    %c0_9 = arith.constant 0 : index
    %c0_10 = arith.constant 0 : index
    %11 = vector.load %arg5[%c0_9, %c0_10] : memref<1x64xf32, #tpu.memory_space<vmem>>, vector<1x64xf32>
    %12 = vector.broadcast %11 : vector<1x64xf32> to vector<16x64xf32>
    %13 = arith.addf %10, %12 : vector<16x64xf32>
    %cst_11 = arith.constant 0.000000e+00 : f32
    %14 = vector.broadcast %cst_11 : f32 to vector<16x64xf32>
    %15 = arith.maximumf %13, %14 : vector<16x64xf32>
    %16 = arith.truncf %15 : vector<16x64xf32> to vector<16x64xbf16>
    %c0_12 = arith.constant 0 : index
    %c0_13 = arith.constant 0 : index
    %17 = vector.load %arg6[%c0_12, %c0_13] : memref<64x64xbf16, #tpu.memory_space<vmem>>, vector<64x64xbf16>
    %cst_14 = arith.constant dense<0.000000e+00> : vector<16x64xf32>
    %18 = tpu.matmul %16, %17, %cst_14 {dimension_numbers = #tpu.dot_dimension_numbers<[1], [0], [0], [1], [0, 0, 1, 1], [], []>} : vector<16x64xbf16>, vector<64x64xbf16>, vector<16x64xf32> -> vector<16x64xf32>
    %c0_15 = arith.constant 0 : index
    %c0_16 = arith.constant 0 : index
    %19 = vector.load %arg7[%c0_15, %c0_16] : memref<1x64xf32, #tpu.memory_space<vmem>>, vector<1x64xf32>
    %20 = vector.broadcast %19 : vector<1x64xf32> to vector<16x64xf32>
    %21 = arith.addf %18, %20 : vector<16x64xf32>
    %c0_17 = arith.constant 0 : index
    %c0_18 = arith.constant 0 : index
    %22 = vector.load %arg8[%c0_17, %c0_18] : memref<4x16xf32, #tpu.memory_space<vmem>>, vector<4x16xf32>
    %cst_19 = arith.constant dense<0.000000e+00> : vector<4x64xf32>
    %23 = tpu.matmul %22, %21, %cst_19 {dimension_numbers = #tpu.dot_dimension_numbers<[1], [0], [0], [1], [0, 0, 1, 1], [], []>} : vector<4x16xf32>, vector<16x64xf32>, vector<4x64xf32> -> vector<4x64xf32>
    %c0_20 = arith.constant 0 : index
    %c0_21 = arith.constant 0 : index
    %24 = vector.load %arg9[%c0_20, %c0_21] : memref<4x16xf32, #tpu.memory_space<vmem>>, vector<4x16xf32>
    %cst_22 = arith.constant dense<0.000000e+00> : vector<4x64xf32>
    %25 = tpu.matmul %24, %21, %cst_22 {dimension_numbers = #tpu.dot_dimension_numbers<[1], [0], [0], [1], [0, 0, 1, 1], [], []>} : vector<4x16xf32>, vector<16x64xf32>, vector<4x64xf32> -> vector<4x64xf32>
    %26 = tpu.concatenate %23, %25 in 1 : vector<4x64xf32>, vector<4x64xf32> -> vector<4x128xf32>
    %c0_23 = arith.constant 0 : index
    %c0_24 = arith.constant 0 : index
    %c0_25 = arith.constant 0 : index
    %27 = vector.load %arg10[%c0_23, %c0_24, %c0_25] : memref<1x4x128xf32, #tpu.memory_space<vmem>>, vector<1x4x128xf32>
    %28 = vector.shape_cast %27 : vector<1x4x128xf32> to vector<4x128xf32>
    %29 = vector.shape_cast %26 : vector<4x128xf32> to vector<1x4x128xf32>
    tpu.vector_store %arg10[%c0_23, %c0_24, %c0_25], %29 {strides = array<i32>} : memref<1x4x128xf32, #tpu.memory_space<vmem>>, vector<1x4x128xf32>,
    return
  }
  func.func @transform_0(%arg0: i32) -> (i32, i32) {
    %c0_i32 = arith.constant 0 : i32
    %c0_i32_0 = arith.constant 0 : i32
    return %arg0, %c0_i32 : i32, i32
  }
  func.func @transform_1(%arg0: i32) -> (i32, i32) {
    %c0_i32 = arith.constant 0 : i32
    %c0_i32_0 = arith.constant 0 : i32
    %c0_i32_1 = arith.constant 0 : i32
    return %c0_i32, %c0_i32_0 : i32, i32
  }
  func.func @transform_2(%arg0: i32) -> (i32, i32) {
    %c0_i32 = arith.constant 0 : i32
    %c0_i32_0 = arith.constant 0 : i32
    %c0_i32_1 = arith.constant 0 : i32
    return %c0_i32, %c0_i32_0 : i32, i32
  }
  func.func @transform_3(%arg0: i32) -> (i32, i32) {
    %c0_i32 = arith.constant 0 : i32
    %c0_i32_0 = arith.constant 0 : i32
    %c0_i32_1 = arith.constant 0 : i32
    return %c0_i32, %c0_i32_0 : i32, i32
  }
  func.func @transform_4(%arg0: i32) -> (i32, i32) {
    %c0_i32 = arith.constant 0 : i32
    %c0_i32_0 = arith.constant 0 : i32
    %c0_i32_1 = arith.constant 0 : i32
    return %c0_i32, %c0_i32_0 : i32, i32
  }
  func.func @transform_5(%arg0: i32) -> (i32, i32) {
    %c0_i32 = arith.constant 0 : i32
    %c0_i32_0 = arith.constant 0 : i32
    %c0_i32_1 = arith.constant 0 : i32
    return %c0_i32, %c0_i32_0 : i32, i32
  }
  func.func @transform_6(%arg0: i32) -> (i32, i32) {
    %c0_i32 = arith.constant 0 : i32
    %c0_i32_0 = arith.constant 0 : i32
    %c0_i32_1 = arith.constant 0 : i32
    return %c0_i32, %c0_i32_0 : i32, i32
  }
  func.func @transform_7(%arg0: i32) -> (i32, i32) {
    %c0_i32 = arith.constant 0 : i32
    %c0_i32_0 = arith.constant 0 : i32
    %c0_i32_1 = arith.constant 0 : i32
    return %c0_i32, %c0_i32_0 : i32, i32
  }
  func.func @transform_8(%arg0: i32) -> (i32, i32) {
    %c0_i32 = arith.constant 0 : i32
    %c0_i32_0 = arith.constant 0 : i32
    %c0_i32_1 = arith.constant 0 : i32
    return %c0_i32, %c0_i32_0 : i32, i32
  }
  func.func @transform_9(%arg0: i32) -> (i32, i32, i32) {
    %c0_i32 = arith.constant 0 : i32
    %c0_i32_0 = arith.constant 0 : i32
    %c0_i32_1 = arith.constant 0 : i32
    return %arg0, %c0_i32, %c0_i32_0 : i32, i32, i32
  }
}

</mosaic_0001>

<llo_original>
// kernel: tpu_custom_call.1
$region0: #{tpu_custom_call.1}
  #allocation0 [shape = 'u32[]', space=smem, size = 0x4, offset = 0x4, fixed_abs, tag = 'smem constant byte address 0x4 - core index']
  #allocation1 [shape = 'u32[144,128]{1,0:T(1,128)}', space=vmem, size = 0x12000, scoped, tag = 'internal scratch']
  %s0 = inlined_call_operand.hbm [shape: bf16[32,32], index: 0, kind: input, shape index: {}]
  %s1 = inlined_call_operand.hbm [shape: bf16[32,64], index: 1, kind: input, shape index: {}]
  %s2 = inlined_call_operand.vmem [shape: f32[1,64], index: 2, kind: input, shape index: {}]
  %s3 = inlined_call_operand.hbm [shape: bf16[64,64], index: 3, kind: input, shape index: {}]
  %s4 = inlined_call_operand.vmem [shape: f32[1,64], index: 4, kind: input, shape index: {}]
  %s5 = inlined_call_operand.hbm [shape: bf16[64,64], index: 5, kind: input, shape index: {}]
  %s6 = inlined_call_operand.vmem [shape: f32[1,64], index: 6, kind: input, shape index: {}]
  %s7 = inlined_call_operand.vmem [shape: f32[4,16], index: 7, kind: input, shape index: {}]
  %s8 = inlined_call_operand.vmem [shape: f32[4,16], index: 8, kind: input, shape index: {}]
  %s9 = inlined_call_operand.hbm [shape: f32[2,4,128], index: 9, kind: output, shape index: {}]
  %s10 = sld [smem:[#allocation0]]
  $region85: #{tpu_custom_call.1} parent=0
    _
  %s12 = ssub.s32 1, %s10
  %s13 = scalar_select 0, %s12, %s10
  $region1: #{tpu_custom_call.1} parent=0
    #allocation2 [shape = 'u8[8192]{0}', space=vmem, size = 0x2000, scoped, tag = 'input window, operand 0']
    #allocation3 [shape = 's32[2]{0}', space=sflag, size = 0x8, scoped, tag = 'scoped memory for tpu_custom_call.1']
    #allocation4 [shape = 's32[2]{0}', space=sflag, size = 0x8, scoped, tag = 'scoped memory for tpu_custom_call.1']
    #allocation5 [shape = 'u8[8192]{0}', space=vmem, size = 0x2000, scoped, tag = 'input window, operand 1, single buffered']
    #allocation6 [shape = 's32[1]{0}', space=sflag, size = 0x4, scoped, tag = 'scoped memory for tpu_custom_call.1']
    #allocation7 [shape = 'u8[16384]{0}', space=vmem, size = 0x4000, scoped, tag = 'input window, operand 3, single buffered']
    #allocation8 [shape = 'u8[16384]{0}', space=vmem, size = 0x4000, scoped, tag = 'input window, operand 5, single buffered']
    #allocation9 [shape = 's32[1]{0}', space=sflag, size = 0x4, scoped, tag = 'scoped memory for tpu_custom_call.1']
    #allocation10 [shape = 'u8[4096]{0}', space=vmem, size = 0x1000, scoped, tag = 'output window, operand 0']
    %14 = vsyncpa [#allocation3], 0
    %s15 = scalar_lea.sflag [#allocation3], 1
    %16 = vsyncpa %s15, 0
    %17 = vsyncpa [#allocation6], 0
    %18 = vsyncpa [#allocation9], 0
    %19 = vsyncpa [#allocation4], 0
    %s20 = scalar_lea.sflag [#allocation4], 1
    %21 = vsyncpa %s20, 0
    loop: start=0, step=1, limit=4
    $region2: #{tpu_custom_call.1} parent=1 // loop_pre_header
      _
    $region3: #{tpu_custom_call.1} parent=1 // loop_header
      %s23 = sphi 0, %s27
      %p24 = scmp.ge.s32.totalorder %s23, 4
      %s33 = sphi 0, %s35
      %s36 = sphi 0, %s33
      %s37 = sphi 0, %s36
      %s53 = sphi 0, %s37
      %s57 = sphi 0, %s57
      %s59 = sphi 0, %s57
      %s60 = sphi 0, %s59
      %s74 = sphi 0, %s60
      %s78 = sphi 0, %s78
      %s80 = sphi 0, %s78
      %s81 = sphi 0, %s80
      %s95 = sphi 0, %s81
      %s99 = sphi 0, %s99
      %s101 = sphi 0, %s99
      %s102 = sphi 0, %s101
      %s116 = sphi 0, %s102
      %s120 = sphi 0, %s120
      %s122 = sphi 0, %s120
      %s123 = sphi 0, %s122
      %s137 = sphi 0, %s123
      %s141 = sphi 0, %s141
      %s143 = sphi 0, %s141
      %s144 = sphi 0, %s143
      %s158 = sphi 0, %s144
      %s162 = sphi 0, %s162
      %s164 = sphi 0, %s162
      %s165 = sphi 0, %s164
      %s179 = sphi 0, %s165
      %s183 = sphi 0, %s183
      %s185 = sphi 0, %s183
      %s186 = sphi 0, %s185
      %s200 = sphi 0, %s186
      %s204 = sphi 0, %s204
      %s206 = sphi 0, %s204
      %s207 = sphi 0, %s206
      %s221 = sphi 0, %s207
      %s227 = sphi 0, %s229
      %s230 = sphi 0, %s227
      %s231 = sphi 0, %s230
      %s247 = sphi 0, %s231
    $region4: #{tpu_custom_call.1} parent=1 // loop_header_branch
      %26 = sbr.rel (%p24) target = $region8
    $region5: #{tpu_custom_call.1} parent=1 // loop_body
      %s28 = ssub.s32 %s23, 1
      %s29 = ssub.s32 %s23, 2
      %s30 = sadd.s32 %s23, 1
      %s31 = ssub.s32 %s23, %s30
      %p32 = scmp.eq.s32.totalorder %s31, 0
      %s34 = sadd.s32 %s33, 1
      %s35 = scalar_select %p32, %s33, %s34
      %p38 = pneg %p32
      %p39 = scmp.eq.s32.totalorder %s23, 1
      %p40 = por %p38, %p39
      %p41 = scmp.ne.s32.totalorder %s33, %s36
      %p42 = scmp.eq.s32.totalorder %s23, 0
      %p43 = por %p41, %p42
      %p44 = scmp.ne.s32.totalorder %s33, %s36
      %p45 = scmp.eq.s32.totalorder %s28, 1
      %p46 = por %p44, %p45
      %p47 = scmp.ne.s32.totalorder %s36, %s37
      %p48 = scmp.eq.s32.totalorder %s28, 0
      %p49 = por %p47, %p48
      %p50 = scmp.ne.s32.totalorder %s36, %s37
      %p51 = scmp.eq.s32.totalorder %s29, 1
      %p52 = por %p50, %p51
      %p54 = scmp.ne.s32.totalorder %s37, %s53
      %p55 = scmp.eq.s32.totalorder %s29, 0
      %p56 = por %p54, %p55
      %s58 = sadd.s32 %s57, 1
      %p61 = scmp.eq.s32.totalorder %s23, 1
      %p62 = scmp.ne.s32.totalorder %s57, %s59
      %p63 = scmp.eq.s32.totalorder %s23, 0
      %p64 = por %p62, %p63
      %p65 = scmp.ne.s32.totalorder %s57, %s59
      %p66 = scmp.eq.s32.totalorder %s28, 1
      %p67 = por %p65, %p66
      %p68 = scmp.ne.s32.totalorder %s59, %s60
      %p69 = scmp.eq.s32.totalorder %s28, 0
      %p70 = por %p68, %p69
      %p71 = scmp.ne.s32.totalorder %s59, %s60
      %p72 = scmp.eq.s32.totalorder %s29, 1
      %p73 = por %p71, %p72
      %p75 = scmp.ne.s32.totalorder %s60, %s74
      %p76 = scmp.eq.s32.totalorder %s29, 0
      %p77 = por %p75, %p76
      %s79 = sadd.s32 %s78, 1
      %p82 = scmp.eq.s32.totalorder %s23, 1
      %p83 = scmp.ne.s32.totalorder %s78, %s80
      %p84 = scmp.eq.s32.totalorder %s23, 0
      %p85 = por %p83, %p84
      %p86 = scmp.ne.s32.totalorder %s78, %s80
      %p87 = scmp.eq.s32.totalorder %s28, 1
      %p88 = por %p86, %p87
      %p89 = scmp.ne.s32.totalorder %s80, %s81
      %p90 = scmp.eq.s32.totalorder %s28, 0
      %p91 = por %p89, %p90
      %p92 = scmp.ne.s32.totalorder %s80, %s81
      %p93 = scmp.eq.s32.totalorder %s29, 1
      %p94 = por %p92, %p93
      %p96 = scmp.ne.s32.totalorder %s81, %s95
      %p97 = scmp.eq.s32.totalorder %s29, 0
      %p98 = por %p96, %p97
      %s100 = sadd.s32 %s99, 1
      %p103 = scmp.eq.s32.totalorder %s23, 1
      %p104 = scmp.ne.s32.totalorder %s99, %s101
      %p105 = scmp.eq.s32.totalorder %s23, 0
      %p106 = por %p104, %p105
      %p107 = scmp.ne.s32.totalorder %s99, %s101
      %p108 = scmp.eq.s32.totalorder %s28, 1
      %p109 = por %p107, %p108
      %p110 = scmp.ne.s32.totalorder %s101, %s102
      %p111 = scmp.eq.s32.totalorder %s28, 0
      %p112 = por %p110, %p111
      %p113 = scmp.ne.s32.totalorder %s101, %s102
      %p114 = scmp.eq.s32.totalorder %s29, 1
      %p115 = por %p113, %p114
      %p117 = scmp.ne.s32.totalorder %s102, %s116
      %p118 = scmp.eq.s32.totalorder %s29, 0
      %p119 = por %p117, %p118
      %s121 = sadd.s32 %s120, 1
      %p124 = scmp.eq.s32.totalorder %s23, 1
      %p125 = scmp.ne.s32.totalorder %s120, %s122
      %p126 = scmp.eq.s32.totalorder %s23, 0
      %p127 = por %p125, %p126
      %p128 = scmp.ne.s32.totalorder %s120, %s122
      %p129 = scmp.eq.s32.totalorder %s28, 1
      %p130 = por %p128, %p129
      %p131 = scmp.ne.s32.totalorder %s122, %s123
      %p132 = scmp.eq.s32.totalorder %s28, 0
      %p133 = por %p131, %p132
      %p134 = scmp.ne.s32.totalorder %s122, %s123
      %p135 = scmp.eq.s32.totalorder %s29, 1
      %p136 = por %p134, %p135
      %p138 = scmp.ne.s32.totalorder %s123, %s137
      %p139 = scmp.eq.s32.totalorder %s29, 0
      %p140 = por %p138, %p139
      %s142 = sadd.s32 %s141, 1
      %p145 = scmp.eq.s32.totalorder %s23, 1
      %p146 = scmp.ne.s32.totalorder %s141, %s143
      %p147 = scmp.eq.s32.totalorder %s23, 0
      %p148 = por %p146, %p147
      %p149 = scmp.ne.s32.totalorder %s141, %s143
      %p150 = scmp.eq.s32.totalorder %s28, 1
      %p151 = por %p149, %p150
      %p152 = scmp.ne.s32.totalorder %s143, %s144
      %p153 = scmp.eq.s32.totalorder %s28, 0
      %p154 = por %p152, %p153
      %p155 = scmp.ne.s32.totalorder %s143, %s144
      %p156 = scmp.eq.s32.totalorder %s29, 1
      %p157 = por %p155, %p156
      %p159 = scmp.ne.s32.totalorder %s144, %s158
      %p160 = scmp.eq.s32.totalorder %s29, 0
      %p161 = por %p159, %p160
      %s163 = sadd.s32 %s162, 1
      %p166 = scmp.eq.s32.totalorder %s23, 1
      %p167 = scmp.ne.s32.totalorder %s162, %s164
      %p168 = scmp.eq.s32.totalorder %s23, 0
      %p169 = por %p167, %p168
      %p170 = scmp.ne.s32.totalorder %s162, %s164
      %p171 = scmp.eq.s32.totalorder %s28, 1
      %p172 = por %p170, %p171
      %p173 = scmp.ne.s32.totalorder %s164, %s165
      %p174 = scmp.eq.s32.totalorder %s28, 0
      %p175 = por %p173, %p174
      %p176 = scmp.ne.s32.totalorder %s164, %s165
      %p177 = scmp.eq.s32.totalorder %s29, 1
      %p178 = por %p176, %p177
      %p180 = scmp.ne.s32.totalorder %s165, %s179
      %p181 = scmp.eq.s32.totalorder %s29, 0
      %p182 = por %p180, %p181
      %s184 = sadd.s32 %s183, 1
      %p187 = scmp.eq.s32.totalorder %s23, 1
      %p188 = scmp.ne.s32.totalorder %s183, %s185
      %p189 = scmp.eq.s32.totalorder %s23, 0
      %p190 = por %p188, %p189
      %p191 = scmp.ne.s32.totalorder %s183, %s185
      %p192 = scmp.eq.s32.totalorder %s28, 1
      %p193 = por %p191, %p192
      %p194 = scmp.ne.s32.totalorder %s185, %s186
      %p195 = scmp.eq.s32.totalorder %s28, 0
      %p196 = por %p194, %p195
      %p197 = scmp.ne.s32.totalorder %s185, %s186
      %p198 = scmp.eq.s32.totalorder %s29, 1
      %p199 = por %p197, %p198
      %p201 = scmp.ne.s32.totalorder %s186, %s200
      %p202 = scmp.eq.s32.totalorder %s29, 0
      %p203 = por %p201, %p202
      %s205 = sadd.s32 %s204, 1
      %p208 = scmp.eq.s32.totalorder %s23, 1
      %p209 = scmp.ne.s32.totalorder %s204, %s206
      %p210 = scmp.eq.s32.totalorder %s23, 0
      %p211 = por %p209, %p210
      %p212 = scmp.ne.s32.totalorder %s204, %s206
      %p213 = scmp.eq.s32.totalorder %s28, 1
      %p214 = por %p212, %p213
      %p215 = scmp.ne.s32.totalorder %s206, %s207
      %p216 = scmp.eq.s32.totalorder %s28, 0
      %p217 = por %p215, %p216
      %p218 = scmp.ne.s32.totalorder %s206, %s207
      %p219 = scmp.eq.s32.totalorder %s29, 1
      %p220 = por %p218, %p219
      %p222 = scmp.ne.s32.totalorder %s207, %s221
      %p223 = scmp.eq.s32.totalorder %s29, 0
      %p224 = por %p222, %p223
      %s225 = ssub.s32 %s23, %s30
      %p226 = scmp.eq.s32.totalorder %s225, 0
      %s228 = sadd.s32 %s227, 1
      %s229 = scalar_select %p226, %s227, %s228
      %p232 = pneg %p226
      %p233 = scmp.eq.s32.totalorder %s23, 1
      %p234 = por %p232, %p233
      %p235 = scmp.ne.s32.totalorder %s227, %s230
      %p236 = scmp.eq.s32.totalorder %s23, 0
      %p237 = por %p235, %p236
      %p238 = scmp.ne.s32.totalorder %s227, %s230
      %p239 = scmp.eq.s32.totalorder %s28, 1
      %p240 = por %p238, %p239
      %p241 = scmp.ne.s32.totalorder %s230, %s231
      %p242 = scmp.eq.s32.totalorder %s28, 0
      %p243 = por %p241, %p242
      %p244 = scmp.ne.s32.totalorder %s230, %s231
      %p245 = scmp.eq.s32.totalorder %s29, 1
      %p246 = por %p244, %p245
      %p248 = scmp.ne.s32.totalorder %s231, %s247
      %p249 = scmp.eq.s32.totalorder %s29, 0
      %p250 = por %p248, %p249
      %p251 = scmp.le.s32.totalorder 1, %s23
      %p252 = scmp.lt.s32.totalorder %s23, 3
      %p253 = pnand %p251, %p252
      %p254 = pneg %p253
      // Predicated region
      $region9: #{tpu_custom_call.1} parent=5 // pred_check
        _
      $region10: #{tpu_custom_call.1} parent=5 // pred_check_branch
        %256 = sbr.rel (%p253) target = $region12
      $region11: #{tpu_custom_call.1} parent=5 // pred_region
        %s257 = ssub.s32 %s23, 1
        // Predicated region
        $region13: #{tpu_custom_call.1} parent=11 // pred_check
          %p258 = pneg %p70
        $region14: #{tpu_custom_call.1} parent=11 // pred_check_branch
          %260 = sbr.rel (%p258) target = $region16
        $region15: #{tpu_custom_call.1} parent=11 // pred_region
          %s262 = ssub.s32 256, 256
          %263 = vsyncadd [#allocation6], %s262
          %s264 = sshll.u32 [#allocation5], 4
          %s265 = int_to_ptr.vmem [resolvable:$true] %s264
          %270 = dma.hbm_to_vmem [thread:$0]  %s1, 256, %s265, [#allocation6], 64, 64, 4
        $region16: #{tpu_custom_call.1} parent=11 // pred_fallthru
          _
        // Predicated region
        $region17: #{tpu_custom_call.1} parent=11 // pred_check
          %p271 = pneg %p91
        $region18: #{tpu_custom_call.1} parent=11 // pred_check_branch
          %273 = sbr.rel (%p271) target = $region20
        $region19: #{tpu_custom_call.1} parent=11 // pred_region
          _
        $region20: #{tpu_custom_call.1} parent=11 // pred_fallthru
          _
        // Predicated region
        $region21: #{tpu_custom_call.1} parent=11 // pred_check
          %p274 = pneg %p112
        $region22: #{tpu_custom_call.1} parent=11 // pred_check_branch
          %276 = sbr.rel (%p274) target = $region24
        $region23: #{tpu_custom_call.1} parent=11 // pred_region
          %s278 = ssub.s32 512, 512
          %279 = vsyncadd [#allocation6], %s278
          %s280 = sshll.u32 [#allocation7], 4
          %s281 = int_to_ptr.vmem [resolvable:$true] %s280
          %286 = dma.hbm_to_vmem [thread:$0]  %s3, 512, %s281, [#allocation6], 64, 64, 4
        $region24: #{tpu_custom_call.1} parent=11 // pred_fallthru
          _
        // Predicated region
        $region25: #{tpu_custom_call.1} parent=11 // pred_check
          %p287 = pneg %p133
        $region26: #{tpu_custom_call.1} parent=11 // pred_check_branch
          %289 = sbr.rel (%p287) target = $region28
        $region27: #{tpu_custom_call.1} parent=11 // pred_region
          _
        $region28: #{tpu_custom_call.1} parent=11 // pred_fallthru
          _
        // Predicated region
        $region29: #{tpu_custom_call.1} parent=11 // pred_check
          %p290 = pneg %p154
        $region30: #{tpu_custom_call.1} parent=11 // pred_check_branch
          %292 = sbr.rel (%p290) target = $region32
        $region31: #{tpu_custom_call.1} parent=11 // pred_region
          %s294 = ssub.s32 512, 512
          %295 = vsyncadd [#allocation9], %s294
          %s296 = sshll.u32 [#allocation8], 4
          %s297 = int_to_ptr.vmem [resolvable:$true] %s296
          %302 = dma.hbm_to_vmem [thread:$0]  %s5, 512, %s297, [#allocation9], 64, 64, 4
        $region32: #{tpu_custom_call.1} parent=11 // pred_fallthru
          _
        // Predicated region
        $region33: #{tpu_custom_call.1} parent=11 // pred_check
          %p303 = pneg %p175
        $region34: #{tpu_custom_call.1} parent=11 // pred_check_branch
          %305 = sbr.rel (%p303) target = $region36
        $region35: #{tpu_custom_call.1} parent=11 // pred_region
          _
        $region36: #{tpu_custom_call.1} parent=11 // pred_fallthru
          _
        // Predicated region
        $region37: #{tpu_custom_call.1} parent=11 // pred_check
          %p306 = pneg %p196
        $region38: #{tpu_custom_call.1} parent=11 // pred_check_branch
          %308 = sbr.rel (%p306) target = $region40
        $region39: #{tpu_custom_call.1} parent=11 // pred_region
          _
        $region40: #{tpu_custom_call.1} parent=11 // pred_fallthru
          _
        // Predicated region
        $region41: #{tpu_custom_call.1} parent=11 // pred_check
          %p309 = pneg %p217
        $region42: #{tpu_custom_call.1} parent=11 // pred_check_branch
          %311 = sbr.rel (%p309) target = $region44
        $region43: #{tpu_custom_call.1} parent=11 // pred_region
          _
        $region44: #{tpu_custom_call.1} parent=11 // pred_fallthru
          _
      $region12: #{tpu_custom_call.1} parent=5 // pred_fallthru
        _
      %p312 = scmp.lt.s32.totalorder %s23, 2
      // Predicated region
      $region45: #{tpu_custom_call.1} parent=5 // pred_check
        %p313 = pneg %p312
      $region46: #{tpu_custom_call.1} parent=5 // pred_check_branch
        %315 = sbr.rel (%p313) target = $region48
      $region47: #{tpu_custom_call.1} parent=5 // pred_region
        // Predicated region
        $region49: #{tpu_custom_call.1} parent=47 // pred_check
          %p316 = pneg %p43
        $region50: #{tpu_custom_call.1} parent=47 // pred_check_branch
          %318 = sbr.rel (%p316) target = $region52
        $region51: #{tpu_custom_call.1} parent=47 // pred_region
          %s319 = sand.u32 %s33, 1
          %s320 = scalar_lea.sflag [#allocation3], %s319
          %s321 = sand.u32 %s33, 1
          %s322 = smul.addr %s321, 8
          %s323 = scalar_lea.vmem [#allocation2], %s322
          %s324 = smul.u32 2, %s23
          %s326 = ssub.s32 128, 128
          %327 = vsyncadd %s320, %s326
          %s328 = smul.addr %s324, 64
          %s329 = scalar_lea.hbm %s0, %s328
          %s330 = sshll.u32 %s323, 4
          %s331 = int_to_ptr.vmem [resolvable:$true] %s330
          %336 = dma.hbm_to_vmem [thread:$0]  %s329, 128, %s331, %s320, 64, 64, 4
        $region52: #{tpu_custom_call.1} parent=47 // pred_fallthru
          _
      $region48: #{tpu_custom_call.1} parent=5 // pred_fallthru
        _
      %p337 = scmp.le.s32.totalorder 1, %s23
      %p338 = scmp.lt.s32.totalorder %s23, 3
      %p339 = pnand %p337, %p338
      %p340 = pneg %p339
      // Predicated region
      $region53: #{tpu_custom_call.1} parent=5 // pred_check
        _
      $region54: #{tpu_custom_call.1} parent=5 // pred_check_branch
        %342 = sbr.rel (%p339) target = $region56
      $region55: #{tpu_custom_call.1} parent=5 // pred_region
        %s343 = ssub.s32 %s23, 1
        %s344 = sand.u32 %s36, 1
        %s345 = scalar_lea.sflag [#allocation3], %s344
        %s346 = sand.u32 %s36, 1
        %s347 = smul.addr %s346, 8
        %s348 = scalar_lea.vmem [#allocation2], %s347
        // Predicated region
        $region57: #{tpu_custom_call.1} parent=55 // pred_check
          %p349 = pneg %p49
        $region58: #{tpu_custom_call.1} parent=55 // pred_check_branch
          %351 = sbr.rel (%p349) target = $region60
        $region59: #{tpu_custom_call.1} parent=55 // pred_region
          %352 = dma.done %s345, 128
        $region60: #{tpu_custom_call.1} parent=55 // pred_fallthru
          _
        // Predicated region
        $region61: #{tpu_custom_call.1} parent=55 // pred_check
          %p353 = pneg %p70
        $region62: #{tpu_custom_call.1} parent=55 // pred_check_branch
          %355 = sbr.rel (%p353) target = $region64
        $region63: #{tpu_custom_call.1} parent=55 // pred_region
          %356 = dma.done [#allocation6], 256
        $region64: #{tpu_custom_call.1} parent=55 // pred_fallthru
          _
        // Predicated region
        $region65: #{tpu_custom_call.1} parent=55 // pred_check
          %p357 = pneg %p112
        $region66: #{tpu_custom_call.1} parent=55 // pred_check_branch
          %359 = sbr.rel (%p357) target = $region68
        $region67: #{tpu_custom_call.1} parent=55 // pred_region
          %360 = dma.done [#allocation6], 512
        $region68: #{tpu_custom_call.1} parent=55 // pred_fallthru
          _
        // Predicated region
        $region69: #{tpu_custom_call.1} parent=55 // pred_check
          %p361 = pneg %p154
        $region70: #{tpu_custom_call.1} parent=55 // pred_check_branch
          %363 = sbr.rel (%p361) target = $region72
        $region71: #{tpu_custom_call.1} parent=55 // pred_region
          %364 = dma.done [#allocation9], 512
        $region72: #{tpu_custom_call.1} parent=55 // pred_fallthru
          _
        %s365 = sand.u32 %s36, 1
        %s366 = scalar_lea.sflag [#allocation3], %s365
        %s367 = sand.u32 %s36, 1
        %s368 = smul.addr %s367, 8
        %s369 = scalar_lea.vmem [#allocation2], %s368
        %p370 = pneg %p49
        %p371 = pneg %p46
        %p372 = pneg %p70
        %p373 = pneg %p67
        %p374 = pneg %p91
        %p375 = pneg %p88
        %p376 = pneg %p112
        %p377 = pneg %p109
        %p378 = pneg %p133
        %p379 = pneg %p130
        %p380 = pneg %p154
        %p381 = pneg %p151
        %p382 = pneg %p175
        %p383 = pneg %p172
        %p384 = pneg %p196
        %p385 = pneg %p193
        %p386 = pneg %p217
        %p387 = pneg %p214
        %p388 = pneg %p243
        %p389 = pneg %p240
        %s390 = sand.u32 %s230, 1
        %s391 = scalar_lea.sflag [#allocation4], %s390
        %s392 = sand.u32 %s230, 1
        %s393 = smul.addr %s392, 4
        %s394 = scalar_lea.vmem [#allocation10], %s393
        %s395 = smul.u32 2, %s28
        %v397 = vld [vmem:[%s348] sm:$0xf]
        %v398 = vld [vmem:[%s348 + $0x4] sm:$0xf]
        %v399 = vld [vmem:[#allocation5] sm:$0xf]
        %v400 = vld [vmem:[#allocation5 + $0x4] sm:$0xf]
        %v401 = vld [vmem:[#allocation5 + $0x8] sm:$0xf]
        %v402 = vld [vmem:[#allocation5 + $0xc] sm:$0xf]
        %v403 = vld [vmem:[%s2] sm:$0x1]
        %v405 = vlaneseq
        %v406 = vshrl.u32 %v405, 7
        %v407 = vsub.s32 0, %v406
        %v408 = vrot.slane %v403, %v407
        %v412 = vunpack.c.l.b16 %v397
        %v413 = vunpack.c.l.b16 %v398
        %v414 = vpack.c.b16 %v413, %v412
        %v419 = vunpack.c.l.b16 %v399
        %v420 = vunpack.c.l.b16 %v400
        %v421 = vunpack.c.l.b16 %v401
        %v422 = vunpack.c.l.b16 %v402
        %v423 = vpack.c.b16 %v420, %v419
        %v424 = vpack.c.b16 %v422, %v421
        %vm427 = vcmask 261120
        %v429 = vsel %vm427, %v414, 0
        %431 = vmatprep.subr.bf16.mxu0 0
        %432 = vmatpush1.bf16.msra.mxu0 %v423
        %433 = vmatprep.subr.bf16.mxu0 0
        %434 = vmatpush1.bf16.msra.mxu0 %v424
        %435 = vmatprep.subr.bf16.mxu0 0
        %436 = vmatpush1.bf16.msra.mxu0 0
        %437 = vmatprep.subr.bf16.mxu0 0
        %438 = vmatpush1.bf16.msra.mxu0 0
        %439 = vmatprep.subr.bf16.mxu0 0
        %440 = vmatpush1.bf16.msra.mxu0 0
        %441 = vmatprep.subr.bf16.mxu0 0
        %442 = vmatpush1.bf16.msra.mxu0 0
        %443 = vmatprep.subr.bf16.mxu0 0
        %444 = vmatpush1.bf16.msra.mxu0 0
        %445 = vmatprep.subr.bf16.mxu0 0
        %446 = vmatpush1.bf16.msra.mxu0 0
        %447 = vmatprep.subr.bf16.mxu0 0
        %448 = vmatpush1.bf16.msra.mxu0 0
        %449 = vmatprep.subr.bf16.mxu0 0
        %450 = vmatpush1.bf16.msra.mxu0 0
        %451 = vmatprep.subr.bf16.mxu0 0
        %452 = vmatpush1.bf16.msra.mxu0 0
        %453 = vmatprep.subr.bf16.mxu0 0
        %454 = vmatpush1.bf16.msra.mxu0 0
        %455 = vmatprep.subr.bf16.mxu0 0
        %456 = vmatpush1.bf16.msra.mxu0 0
        %457 = vmatprep.subr.bf16.mxu0 0
        %458 = vmatpush1.bf16.msra.mxu0 0
        %459 = vmatprep.subr.bf16.mxu0 0
        %460 = vmatpush1.bf16.msra.mxu0 0
        %461 = vmatprep.subr.bf16.mxu0 0
        %462 = vmatpush1.bf16.msra.mxu0 0
        %463 = vmatprep.mubr.bf16.mxu0 0
        %464 = vmatmul.mubr.bf16.gmra.mrb[0].mxu0 %v429
        %v465 = vpop.f32.mrb[0].mxu0
        %v466 = vadd.f32 %v408, %v465
        %v467 = vpop.f32.mrb[0].mxu0
        %v468 = vpop.f32.mrb[0].mxu0
        %v469 = vadd.f32 %v408, %v468
        %v470 = vpop.f32.mrb[0].mxu0
        %471 = vdwg.mxu0
        %v472 = vmax.f32 %v466, 0.0
        %v473 = vmax.f32 %v469, 0.0
        %v474 = vpack.c.bf16 %v473, %v472
        %v475 = vld [vmem:[#allocation7] sm:$0xf]
        %v476 = vld [vmem:[#allocation7 + $0x4] sm:$0xf]
        %v477 = vld [vmem:[#allocation7 + $0x8] sm:$0xf]
        %v478 = vld [vmem:[#allocation7 + $0xc] sm:$0xf]
        %v479 = vld [vmem:[#allocation7 + $0x10] sm:$0xf]
        %v480 = vld [vmem:[#allocation7 + $0x14] sm:$0xf]
        %v481 = vld [vmem:[#allocation7 + $0x18] sm:$0xf]
        %v482 = vld [vmem:[#allocation7 + $0x1c] sm:$0xf]
        %v483 = vld [vmem:[%s4] sm:$0x1]
        %v485 = vlaneseq
        %v486 = vshrl.u32 %v485, 7
        %v487 = vsub.s32 0, %v486
        %v488 = vrot.slane %v483, %v487
        %v498 = vunpack.c.l.b16 %v475
        %v499 = vunpack.c.l.b16 %v476
        %v500 = vunpack.c.l.b16 %v477
        %v501 = vunpack.c.l.b16 %v478
        %v502 = vunpack.c.l.b16 %v479
        %v503 = vunpack.c.l.b16 %v480
        %v504 = vunpack.c.l.b16 %v481
        %v505 = vunpack.c.l.b16 %v482
        %v506 = vpack.c.b16 %v499, %v498
        %v507 = vpack.c.b16 %v501, %v500
        %v508 = vpack.c.b16 %v503, %v502
        %v509 = vpack.c.b16 %v505, %v504
        %vm514 = vcmask 523264
        %v516 = vsel %vm514, %v474, 0
        %518 = vmatprep.subr.bf16.mxu0 0
        %519 = vmatpush1.bf16.msra.mxu0 %v506
        %520 = vmatprep.subr.bf16.mxu0 0
        %521 = vmatpush1.bf16.msra.mxu0 %v507
        %522 = vmatprep.subr.bf16.mxu0 0
        %523 = vmatpush1.bf16.msra.mxu0 %v508
        %524 = vmatprep.subr.bf16.mxu0 0
        %525 = vmatpush1.bf16.msra.mxu0 %v509
        %526 = vmatprep.subr.bf16.mxu0 0
        %527 = vmatpush1.bf16.msra.mxu0 0
        %528 = vmatprep.subr.bf16.mxu0 0
        %529 = vmatpush1.bf16.msra.mxu0 0
        %530 = vmatprep.subr.bf16.mxu0 0
        %531 = vmatpush1.bf16.msra.mxu0 0
        %532 = vmatprep.subr.bf16.mxu0 0
        %533 = vmatpush1.bf16.msra.mxu0 0
        %534 = vmatprep.subr.bf16.mxu0 0
        %535 = vmatpush1.bf16.msra.mxu0 0
        %536 = vmatprep.subr.bf16.mxu0 0
        %537 = vmatpush1.bf16.msra.mxu0 0
        %538 = vmatprep.subr.bf16.mxu0 0
        %539 = vmatpush1.bf16.msra.mxu0 0
        %540 = vmatprep.subr.bf16.mxu0 0
        %541 = vmatpush1.bf16.msra.mxu0 0
        %542 = vmatprep.subr.bf16.mxu0 0
        %543 = vmatpush1.bf16.msra.mxu0 0
        %544 = vmatprep.subr.bf16.mxu0 0
        %545 = vmatpush1.bf16.msra.mxu0 0
        %546 = vmatprep.subr.bf16.mxu0 0
        %547 = vmatpush1.bf16.msra.mxu0 0
        %548 = vmatprep.subr.bf16.mxu0 0
        %549 = vmatpush1.bf16.msra.mxu0 0
        %550 = vmatprep.mubr.bf16.mxu0 0
        %551 = vmatmul.mubr.bf16.gmra.mrb[0].mxu0 %v516
        %v552 = vpop.f32.mrb[0].mxu0
        %v553 = vadd.f32 %v488, %v552
        %v554 = vpop.f32.mrb[0].mxu0
        %v555 = vpop.f32.mrb[0].mxu0
        %v556 = vadd.f32 %v488, %v555
        %v557 = vpop.f32.mrb[0].mxu0
        %558 = vdwg.mxu0
        %v559 = vmax.f32 %v553, 0.0
        %v560 = vmax.f32 %v556, 0.0
        %v561 = vpack.c.bf16 %v560, %v559
        %v562 = vld [vmem:[#allocation8] sm:$0xf]
        %v563 = vld [vmem:[#allocation8 + $0x4] sm:$0xf]
        %v564 = vld [vmem:[#allocation8 + $0x8] sm:$0xf]
        %v565 = vld [vmem:[#allocation8 + $0xc] sm:$0xf]
        %v566 = vld [vmem:[#allocation8 + $0x10] sm:$0xf]
        %v567 = vld [vmem:[#allocation8 + $0x14] sm:$0xf]
        %v568 = vld [vmem:[#allocation8 + $0x18] sm:$0xf]
        %v569 = vld [vmem:[#allocation8 + $0x1c] sm:$0xf]
        %v570 = vld [vmem:[%s6] sm:$0x1]
        %v572 = vlaneseq
        %v573 = vshrl.u32 %v572, 7
        %v574 = vsub.s32 0, %v573
        %v575 = vrot.slane %v570, %v574
        %v585 = vunpack.c.l.b16 %v562
        %v586 = vunpack.c.l.b16 %v563
        %v587 = vunpack.c.l.b16 %v564
        %v588 = vunpack.c.l.b16 %v565
        %v589 = vunpack.c.l.b16 %v566
        %v590 = vunpack.c.l.b16 %v567
        %v591 = vunpack.c.l.b16 %v568
        %v592 = vunpack.c.l.b16 %v569
        %v593 = vpack.c.b16 %v586, %v585
        %v594 = vpack.c.b16 %v588, %v587
        %v595 = vpack.c.b16 %v590, %v589
        %v596 = vpack.c.b16 %v592, %v591
        %v602 = vsel %vm514, %v561, 0
        %604 = vmatprep.subr.bf16.mxu0 0
        %605 = vmatpush1.bf16.msra.mxu0 %v593
        %606 = vmatprep.subr.bf16.mxu0 0
        %607 = vmatpush1.bf16.msra.mxu0 %v594
        %608 = vmatprep.subr.bf16.mxu0 0
        %609 = vmatpush1.bf16.msra.mxu0 %v595
        %610 = vmatprep.subr.bf16.mxu0 0
        %611 = vmatpush1.bf16.msra.mxu0 %v596
        %612 = vmatprep.subr.bf16.mxu0 0
        %613 = vmatpush1.bf16.msra.mxu0 0
        %614 = vmatprep.subr.bf16.mxu0 0
        %615 = vmatpush1.bf16.msra.mxu0 0
        %616 = vmatprep.subr.bf16.mxu0 0
        %617 = vmatpush1.bf16.msra.mxu0 0
        %618 = vmatprep.subr.bf16.mxu0 0
        %619 = vmatpush1.bf16.msra.mxu0 0
        %620 = vmatprep.subr.bf16.mxu0 0
        %621 = vmatpush1.bf16.msra.mxu0 0
        %622 = vmatprep.subr.bf16.mxu0 0
        %623 = vmatpush1.bf16.msra.mxu0 0
        %624 = vmatprep.subr.bf16.mxu0 0
        %625 = vmatpush1.bf16.msra.mxu0 0
        %626 = vmatprep.subr.bf16.mxu0 0
        %627 = vmatpush1.bf16.msra.mxu0 0
        %628 = vmatprep.subr.bf16.mxu0 0
        %629 = vmatpush1.bf16.msra.mxu0 0
        %630 = vmatprep.subr.bf16.mxu0 0
        %631 = vmatpush1.bf16.msra.mxu0 0
        %632 = vmatprep.subr.bf16.mxu0 0
        %633 = vmatpush1.bf16.msra.mxu0 0
        %634 = vmatprep.subr.bf16.mxu0 0
        %635 = vmatpush1.bf16.msra.mxu0 0
        %636 = vmatprep.mubr.bf16.mxu0 0
        %637 = vmatmul.mubr.bf16.gmra.mrb[0].mxu0 %v602
        %v638 = vpop.f32.mrb[0].mxu0
        %v639 = vadd.f32 %v575, %v638
        %v640 = vpop.f32.mrb[0].mxu0
        %v641 = vpop.f32.mrb[0].mxu0
        %v642 = vadd.f32 %v575, %v641
        %v643 = vpop.f32.mrb[0].mxu0
        %644 = vdwg.mxu0
        %v645 = vld [vmem:[%s7] sm:$0xf]
        %vm646 = vcmask 130048
        %v648 = vsel %vm646, %v645, 0
        %650 = vmatprep.subr.mxu0 0.0
        %651 = vmatpush1.msra.mxu0 %v639
        %652 = vmatprep.subr.mxu0 0.0
        %653 = vmatpush1.msra.mxu0 %v642
        %654 = vmatprep.subr.mxu0 0.0
        %655 = vmatpush1.msra.mxu0 0.0
        %656 = vmatprep.subr.mxu0 0.0
        %657 = vmatpush1.msra.mxu0 0.0
        %658 = vmatprep.subr.mxu0 0.0
        %659 = vmatpush1.msra.mxu0 0.0
        %660 = vmatprep.subr.mxu0 0.0
        %661 = vmatpush1.msra.mxu0 0.0
        %662 = vmatprep.subr.mxu0 0.0
        %663 = vmatpush1.msra.mxu0 0.0
        %664 = vmatprep.subr.mxu0 0.0
        %665 = vmatpush1.msra.mxu0 0.0
        %666 = vmatprep.subr.mxu0 0.0
        %667 = vmatpush1.msra.mxu0 0.0
        %668 = vmatprep.subr.mxu0 0.0
        %669 = vmatpush1.msra.mxu0 0.0
        %670 = vmatprep.subr.mxu0 0.0
        %671 = vmatpush1.msra.mxu0 0.0
        %672 = vmatprep.subr.mxu0 0.0
        %673 = vmatpush1.msra.mxu0 0.0
        %674 = vmatprep.subr.mxu0 0.0
        %675 = vmatpush1.msra.mxu0 0.0
        %676 = vmatprep.subr.mxu0 0.0
        %677 = vmatpush1.msra.mxu0 0.0
        %678 = vmatprep.subr.mxu0 0.0
        %679 = vmatpush1.msra.mxu0 0.0
        %680 = vmatprep.subr.mxu0 0.0
        %681 = vmatpush1.msra.mxu0 0.0
        %682 = vmatprep.subr.mxu0 0.0
        %683 = vmatpush1.msra.mxu0 0.0
        %684 = vmatprep.subr.mxu0 0.0
        %685 = vmatpush1.msra.mxu0 0.0
        %686 = vmatprep.subr.mxu0 0.0
        %687 = vmatpush1.msra.mxu0 0.0
        %688 = vmatprep.subr.mxu0 0.0
        %689 = vmatpush1.msra.mxu0 0.0
        %690 = vmatprep.subr.mxu0 0.0
        %691 = vmatpush1.msra.mxu0 0.0
        %692 = vmatprep.subr.mxu0 0.0
        %693 = vmatpush1.msra.mxu0 0.0
        %694 = vmatprep.subr.mxu0 0.0
        %695 = vmatpush1.msra.mxu0 0.0
        %696 = vmatprep.subr.mxu0 0.0
        %697 = vmatpush1.msra.mxu0 0.0
        %698 = vmatprep.subr.mxu0 0.0
        %699 = vmatpush1.msra.mxu0 0.0
        %700 = vmatprep.subr.mxu0 0.0
        %701 = vmatpush1.msra.mxu0 0.0
        %702 = vmatprep.subr.mxu0 0.0
        %703 = vmatpush1.msra.mxu0 0.0
        %704 = vmatprep.subr.mxu0 0.0
        %705 = vmatpush1.msra.mxu0 0.0
        %706 = vmatprep.subr.mxu0 0.0
        %707 = vmatpush1.msra.mxu0 0.0
        %708 = vmatprep.subr.mxu0 0.0
        %709 = vmatpush1.msra.mxu0 0.0
        %710 = vmatprep.subr.mxu0 0.0
        %711 = vmatpush1.msra.mxu0 0.0
        %712 = vmatprep.subr.mxu0 0.0
        %713 = vmatpush1.msra.mxu0 0.0
        %714 = vmatprep.mubr.f32.mxu0 0.0
        %715 = vmatmul.mubr.f32.gmra.mrb[0].mxu0 %v648
        %v716 = vpop.f32.mrb[0].mxu0
        %v717 = vadd.f32 0.0, %v716
        %v718 = vpop.f32.mrb[0].mxu0
        %719 = vdwg.mxu0
        %v720 = vld [vmem:[%s8] sm:$0xf]
        %v722 = vsel %vm646, %v720, 0
        %724 = vmatprep.subr.mxu0 0.0
        %725 = vmatpush1.msra.mxu0 %v639
        %726 = vmatprep.subr.mxu0 0.0
        %727 = vmatpush1.msra.mxu0 %v642
        %728 = vmatprep.subr.mxu0 0.0
        %729 = vmatpush1.msra.mxu0 0.0
        %730 = vmatprep.subr.mxu0 0.0
        %731 = vmatpush1.msra.mxu0 0.0
        %732 = vmatprep.subr.mxu0 0.0
        %733 = vmatpush1.msra.mxu0 0.0
        %734 = vmatprep.subr.mxu0 0.0
        %735 = vmatpush1.msra.mxu0 0.0
        %736 = vmatprep.subr.mxu0 0.0
        %737 = vmatpush1.msra.mxu0 0.0
        %738 = vmatprep.subr.mxu0 0.0
        %739 = vmatpush1.msra.mxu0 0.0
        %740 = vmatprep.subr.mxu0 0.0
        %741 = vmatpush1.msra.mxu0 0.0
        %742 = vmatprep.subr.mxu0 0.0
        %743 = vmatpush1.msra.mxu0 0.0
        %744 = vmatprep.subr.mxu0 0.0
        %745 = vmatpush1.msra.mxu0 0.0
        %746 = vmatprep.subr.mxu0 0.0
        %747 = vmatpush1.msra.mxu0 0.0
        %748 = vmatprep.subr.mxu0 0.0
        %749 = vmatpush1.msra.mxu0 0.0
        %750 = vmatprep.subr.mxu0 0.0
        %751 = vmatpush1.msra.mxu0 0.0
        %752 = vmatprep.subr.mxu0 0.0
        %753 = vmatpush1.msra.mxu0 0.0
        %754 = vmatprep.subr.mxu0 0.0
        %755 = vmatpush1.msra.mxu0 0.0
        %756 = vmatprep.subr.mxu0 0.0
        %757 = vmatpush1.msra.mxu0 0.0
        %758 = vmatprep.subr.mxu0 0.0
        %759 = vmatpush1.msra.mxu0 0.0
        %760 = vmatprep.subr.mxu0 0.0
        %761 = vmatpush1.msra.mxu0 0.0
        %762 = vmatprep.subr.mxu0 0.0
        %763 = vmatpush1.msra.mxu0 0.0
        %764 = vmatprep.subr.mxu0 0.0
        %765 = vmatpush1.msra.mxu0 0.0
        %766 = vmatprep.subr.mxu0 0.0
        %767 = vmatpush1.msra.mxu0 0.0
        %768 = vmatprep.subr.mxu0 0.0
        %769 = vmatpush1.msra.mxu0 0.0
        %770 = vmatprep.subr.mxu0 0.0
        %771 = vmatpush1.msra.mxu0 0.0
        %772 = vmatprep.subr.mxu0 0.0
        %773 = vmatpush1.msra.mxu0 0.0
        %774 = vmatprep.subr.mxu0 0.0
        %775 = vmatpush1.msra.mxu0 0.0
        %776 = vmatprep.subr.mxu0 0.0
        %777 = vmatpush1.msra.mxu0 0.0
        %778 = vmatprep.subr.mxu0 0.0
        %779 = vmatpush1.msra.mxu0 0.0
        %780 = vmatprep.subr.mxu0 0.0
        %781 = vmatpush1.msra.mxu0 0.0
        %782 = vmatprep.subr.mxu0 0.0
        %783 = vmatpush1.msra.mxu0 0.0
        %784 = vmatprep.subr.mxu0 0.0
        %785 = vmatpush1.msra.mxu0 0.0
        %786 = vmatprep.subr.mxu0 0.0
        %787 = vmatpush1.msra.mxu0 0.0
        %788 = vmatprep.mubr.f32.mxu0 0.0
        %789 = vmatmul.mubr.f32.gmra.mrb[0].mxu0 %v722
        %v790 = vpop.f32.mrb[0].mxu0
        %v791 = vadd.f32 0.0, %v790
        %v792 = vpop.f32.mrb[0].mxu0
        %793 = vdwg.mxu0
        %795 = vrot.lane.b32.xlu0 %v791, 64
        %v796 = vpop.permute.xlu0 %795
        %v798 = vsel %vm514, %v717, %v796
        %799 = vst [vmem:[%s394] sm:$0xf] %v798
        %s800 = sand.u32 %s230, 1
        %s801 = scalar_lea.sflag [#allocation4], %s800
        %s802 = sand.u32 %s230, 1
        %s803 = smul.addr %s802, 4
        %s804 = scalar_lea.vmem [#allocation10], %s803
        // Predicated region
        $region73: #{tpu_custom_call.1} parent=55 // pred_check
          %p805 = pneg %p240
        $region74: #{tpu_custom_call.1} parent=55 // pred_check_branch
          %807 = sbr.rel (%p805) target = $region76
        $region75: #{tpu_custom_call.1} parent=55 // pred_region
          %s809 = ssub.s32 64, 64
          %810 = vsyncadd %s801, %s809
          %s811 = smul.addr %s28, 64
          %s812 = scalar_lea.hbm %s9, %s811
          %s814 = sshll.u32 %s804, 4
          %s815 = int_to_ptr.vmem [resolvable:$true] %s814
          %817 = dma.vmem_to_hbm [thread:$0]  %s815, 64, %s812, %s801
        $region76: #{tpu_custom_call.1} parent=55 // pred_fallthru
          _
      $region56: #{tpu_custom_call.1} parent=5 // pred_fallthru
        _
      %p818 = scmp.le.s32.totalorder 2, %s23
      // Predicated region
      $region77: #{tpu_custom_call.1} parent=5 // pred_check
        %p819 = pneg %p818
      $region78: #{tpu_custom_call.1} parent=5 // pred_check_branch
        %821 = sbr.rel (%p819) target = $region80
      $region79: #{tpu_custom_call.1} parent=5 // pred_region
        %s822 = ssub.s32 %s23, 2
        // Predicated region
        $region81: #{tpu_custom_call.1} parent=79 // pred_check
          %p823 = pneg %p246
        $region82: #{tpu_custom_call.1} parent=79 // pred_check_branch
          %825 = sbr.rel (%p823) target = $region84
        $region83: #{tpu_custom_call.1} parent=79 // pred_region
          %s826 = sand.u32 %s231, 1
          %s827 = scalar_lea.sflag [#allocation4], %s826
          %s828 = sand.u32 %s231, 1
          %s829 = smul.addr %s828, 4
          %s830 = scalar_lea.vmem [#allocation10], %s829
          %831 = dma.done %s827, 64
        $region84: #{tpu_custom_call.1} parent=79 // pred_fallthru
          _
      $region80: #{tpu_custom_call.1} parent=5 // pred_fallthru
        _
    $region6: #{tpu_custom_call.1} parent=1 // loop_footer
      %s27 = sadd.s32 1, %s23
    $region7: #{tpu_custom_call.1} parent=1 // loop_footer_branch
      %22 = sbr.rel target = $region3
    $region8: #{tpu_custom_call.1} parent=1 // loop_exit
      _
    %832 = vsyncpa [#allocation3], 1
    %s833 = scalar_lea.sflag [#allocation3], 1
    %834 = vsyncpa %s833, 1
    %835 = vsyncpa [#allocation6], 1
    %836 = vsyncpa [#allocation9], 1
    %837 = vsyncpa [#allocation4], 1
    %s838 = scalar_lea.sflag [#allocation4], 1
    %839 = vsyncpa %s838, 1

</llo_original>
